<compile_context>
chip_gen: v7x
topology: tpu7x:2x2x1
jax: 0.10.0
libtpu: 0.0.40
codegen_flags: <defaults>
</compile_context>

<pallas_src>
import jax
import jax.numpy as jnp
from jax.experimental import pallas as pl
from jax.experimental.pallas import tpu as pltpu

THRESHOLD = 1.0 - 0.1  # matches self.threshold = 1 - 0.1


# ---------------------------------------------------------------------------
# Fused ACT kernel: grid = (B, L_tiles, max_hop)
# ---------------------------------------------------------------------------
def _act_fused_kernel(state_ref, time_ref, pos_ref, wp_ref, bp_ref, wf_ref, bf_ref,
                      prev_ref, rem_ref, nu_ref,
                      state_sc, hp_sc):
    t = pl.program_id(2)

    # New (b, l) tile starts at t == 0: initialize the VMEM-resident carries.
    @pl.when(t == 0)
    def _init():
        state_sc[...] = state_ref[...]
        hp_sc[...] = jnp.zeros_like(hp_sc)
        prev_ref[...] = jnp.zeros_like(prev_ref)
        rem_ref[...] = jnp.zeros_like(rem_ref)
        nu_ref[...] = jnp.zeros_like(nu_ref)

    # s = state + time_enc[:, :L, :] + pos_enc[:, step, :]   (broadcasts)
    s = state_sc[...] + time_ref[...] + pos_ref[...]                    # (TL, H)

    # p = sigmoid(Linear(H, 1)(s))  — VPU multiply + lane reduce, no 1-wide MXU matmul.
    logits = jnp.sum(s * wp_ref[...], axis=-1, keepdims=True) + bp_ref[...]  # (TL, 1)
    p = jax.nn.sigmoid(logits)

    hp = hp_sc[...]                                                     # (TL, 1)
    rem = rem_ref[...]
    nu = nu_ref[...]

    still = (hp < 1.0).astype(jnp.float32)
    hp_plus = hp + p * still                                            # shared temp
    new_halted = (hp_plus > THRESHOLD).astype(jnp.float32) * still
    still = (hp_plus <= THRESHOLD).astype(jnp.float32) * still
    hp = hp + p * still
    rem = rem + new_halted * (1.0 - hp)
    hp = hp + new_halted * rem
    nu = nu + still + new_halted
    uw = p * still + new_halted * rem                                   # (TL, 1)

    # Transition fn (representative): Linear(H, H) + ReLU on the MXU.
    new_state = jnp.maximum(
        jnp.dot(s, wf_ref[...], preferred_element_type=jnp.float32) + bf_ref[...],
        0.0)                                                            # (TL, H)

    # Blend into the VMEM-resident previous_state accumulator.
    prev_ref[...] = new_state * uw + prev_ref[...] * (1.0 - uw)

    # Persist carries for the next step.
    rem_ref[...] = rem
    nu_ref[...] = nu
    state_sc[...] = new_state
    hp_sc[...] = hp


# ---------------------------------------------------------------------------
# Wrapper
# ---------------------------------------------------------------------------
def act_basic_forward(state, inputs, time_enc, pos_enc, max_hop, wp, bp, wf, bf,
                      *, seq_tile=None):
    B, L, H = inputs.shape
    f32 = jnp.float32

    if seq_tile is None:
        # Full L for small sequences; for long sequences pick a 128-row-ish tile
        # that divides L so blocks stay (8,128)-friendly and fit VMEM.
        seq_tile = L
        if L > 256:
            for cand in (512, 256, 128):
                if L % cand == 0:
                    seq_tile = cand
                    break
    assert L % seq_tile == 0
    TL = seq_tile
    n_lt = L // TL

    state_f = state.astype(f32)                                  # (B, L, H)
    time_f = time_enc[:, :L, :].astype(f32)                      # (1, L, H)
    pos_f = pos_enc[0, :max_hop, :].reshape(max_hop, 1, H).astype(f32)  # (max_hop, 1, H)
    wp_row = wp.reshape(1, H).astype(f32)                        # (1, H)
    bp2 = bp.reshape(1, 1).astype(f32)                           # (1, 1)
    wf_f = wf.astype(f32)                                        # (H, H)
    bf2 = bf.reshape(1, H).astype(f32)                           # (1, H)

    out_shape = (
        jax.ShapeDtypeStruct((B, L, H), f32),   # previous_state
        jax.ShapeDtypeStruct((B, L, 1), f32),   # remainders
        jax.ShapeDtypeStruct((B, L, 1), f32),   # n_updates
    )

    grid_spec = pltpu.PrefetchScalarGridSpec(
        num_scalar_prefetch=0,
        grid=(B, n_lt, max_hop),
        in_specs=[
            pl.BlockSpec((None, TL, H), lambda b, l, t: (b, l, 0)),  # state (used at t==0)
            pl.BlockSpec((None, TL, H), lambda b, l, t: (0, l, 0)),  # time_enc (batch bcast)
            pl.BlockSpec((None, 1, H),  lambda b, l, t: (t, 0, 0)),  # pos_enc[step]
            pl.BlockSpec((1, H),        lambda b, l, t: (0, 0)),     # wp (as row)
            pl.BlockSpec((1, 1),        lambda b, l, t: (0, 0)),     # bp
            pl.BlockSpec((H, H),        lambda b, l, t: (0, 0)),     # wf
            pl.BlockSpec((1, H),        lambda b, l, t: (0, 0)),     # bf
        ],
        out_specs=(
            pl.BlockSpec((None, TL, H), lambda b, l, t: (b, l, 0)),  # resident across t
            pl.BlockSpec((None, TL, 1), lambda b, l, t: (b, l, 0)),
            pl.BlockSpec((None, TL, 1), lambda b, l, t: (b, l, 0)),
        ),
        scratch_shapes=[
            pltpu.VMEM((TL, H), f32),   # evolving state carry
            pltpu.VMEM((TL, 1), f32),   # halting_probability carry
        ],
    )

    prev, rem, nu = pl.pallas_call(
        _act_fused_kernel,
        out_shape=out_shape,
        grid_spec=grid_spec,
        compiler_params=pltpu.CompilerParams(
            dimension_semantics=("parallel", "parallel", "arbitrary"),
            vmem_limit_bytes=32 * 1024 * 1024,
        ),
    )(state_f, time_f, pos_f, wp_row, bp2, wf_f, bf2)

    return prev, (rem[..., 0], nu[..., 0])


# ---------------------------------------------------------------------------
# Pure-JAX reference (mirrors the PyTorch code) for validation
# ---------------------------------------------------------------------------
def act_basic_reference(state, inputs, fn_ref, time_enc, pos_enc, max_hop, wp, bp):
    B, L, H = inputs.shape
    hp = jnp.zeros((B, L), jnp.float32)
    rem = jnp.zeros((B, L), jnp.float32)
    nu = jnp.zeros((B, L), jnp.float32)
    prev = jnp.zeros_like(inputs)
    for step in range(max_hop):
        state = state + time_enc[:, :L, :]
        state = state + pos_enc[:, step, :][:, None, :]
        p = jax.nn.sigmoid(jnp.einsum('blh,ho->blo', state, wp)[..., 0] + bp[0, 0])
        still = (hp < 1.0).astype(jnp.float32)
        new_halted = ((hp + p * still) > THRESHOLD).astype(jnp.float32) * still
        still = ((hp + p * still) <= THRESHOLD).astype(jnp.float32) * still
        hp = hp + p * still
        rem = rem + new_halted * (1.0 - hp)
        hp = hp + new_halted * rem
        nu = nu + still + new_halted
        uw = p * still + new_halted * rem
        state = fn_ref(state)
        prev = state * uw[..., None] + prev * (1.0 - uw[..., None])
    return prev, (rem, nu)


# ---------------------------------------------------------------------------
if __name__ == "__main__":
    B, L, H = 2, 8, 32
    MAX_HOP = 4
    f32 = jnp.float32

    key = jax.random.PRNGKey(0)
    k1, k2, k3, k4, k5, k6, k7 = jax.random.split(key, 7)

    state = jax.random.normal(k1, (B, L, H), f32)
    inputs = jax.random.normal(k2, (B, L, H), f32)
    time_enc = 0.1 * jax.random.normal(k3, (1, L, H), f32)
    pos_enc = 0.1 * jax.random.normal(k4, (1, MAX_HOP, H), f32)

    # Module parameters: self.p = nn.Linear(H, 1), bias filled with 1.
    wp = jax.random.normal(k5, (H, 1), f32) / jnp.sqrt(H)
    bp = jnp.ones((1, 1), f32)

    # External transition fn `fn` parameters (Linear(H, H) + ReLU).
    wf = jax.random.normal(k6, (H, H), f32) / jnp.sqrt(H)
    bf = 0.1 * jax.random.normal(k7, (1, H), f32)

    prev_state, (remainders, n_updates) = act_basic_forward(
        state, inputs, time_enc, pos_enc, MAX_HOP, wp, bp, wf, bf)
    prev_state = jax.block_until_ready(prev_state)
    remainders = jax.block_until_ready(remainders)
    n_updates = jax.block_until_ready(n_updates)

    # Validate against the pure-JAX reference.
    fn_ref = lambda x3d: jnp.maximum(jnp.einsum('blh,hk->blk', x3d, wf) + bf[0], 0.0)
    ref_prev, (ref_rem, ref_nu) = act_basic_reference(
        state, inputs, fn_ref, time_enc, pos_enc, MAX_HOP, wp, bp)
    assert jnp.allclose(prev_state, ref_prev, rtol=1e-3, atol=1e-3)
    assert jnp.allclose(remainders, ref_rem, rtol=1e-3, atol=1e-3)
    assert jnp.allclose(n_updates, ref_nu, rtol=1e-3, atol=1e-3)

    print("KERNEL_OK")
</pallas_src>

<mosaic_0001>
module attributes {stable_mosaic.version = 11 : i64} {
  func.func @_act_fused_kernel(%arg0: i32, %arg1: i32, %arg2: i32, %arg3: memref<1x8x32xf32, #tpu.memory_space<vmem>>, %arg4: memref<1x8x32xf32, #tpu.memory_space<vmem>>, %arg5: memref<1x1x32xf32, #tpu.memory_space<vmem>>, %arg6: memref<1x32xf32, #tpu.memory_space<vmem>>, %arg7: memref<1x1xf32, #tpu.memory_space<vmem>>, %arg8: memref<32x32xf32, #tpu.memory_space<vmem>>, %arg9: memref<1x32xf32, #tpu.memory_space<vmem>>, %arg10: memref<1x8x32xf32, #tpu.memory_space<vmem>>, %arg11: memref<1x8x1xf32, #tpu.memory_space<vmem>>, %arg12: memref<1x8x1xf32, #tpu.memory_space<vmem>>, %arg13: memref<8x32xf32, #tpu.memory_space<vmem>>, %arg14: memref<8x1xf32, #tpu.memory_space<vmem>>) attributes {dimension_semantics = [#tpu.dimension_semantics<parallel>, #tpu.dimension_semantics<parallel>, #tpu.dimension_semantics<arbitrary>], iteration_bounds = array<i64: 2, 1, 4>, scalar_prefetch = 0 : i64, scratch_operands = 2 : i64, tpu.core_type = #tpu.core_type<tc>, window_params = [{transform_indices = @transform_0, window_bounds = array<i64: 1, 8, 32>}, {transform_indices = @transform_1, window_bounds = array<i64: 1, 8, 32>}, {transform_indices = @transform_2, window_bounds = array<i64: 1, 1, 32>}, {pipeline_mode = #tpu.pipeline_mode<synchronous>, transform_indices = @transform_3, window_bounds = array<i64: 1, 32>}, {pipeline_mode = #tpu.pipeline_mode<synchronous>, transform_indices = @transform_4, window_bounds = array<i64: 1, 1>}, {pipeline_mode = #tpu.pipeline_mode<synchronous>, transform_indices = @transform_5, window_bounds = array<i64: 32, 32>}, {pipeline_mode = #tpu.pipeline_mode<synchronous>, transform_indices = @transform_6, window_bounds = array<i64: 1, 32>}, {transform_indices = @transform_7, window_bounds = array<i64: 1, 8, 32>}, {transform_indices = @transform_8, window_bounds = array<i64: 1, 8, 1>}, {transform_indices = @transform_9, window_bounds = array<i64: 1, 8, 1>}]} {
    %c0_i32 = arith.constant 0 : i32
    %0 = arith.cmpi eq, %arg2, %c0_i32 : i32
    %1 = arith.extui %0 : i1 to i32
    %c0_i32_0 = arith.constant 0 : i32
    %2 = arith.cmpi ne, %1, %c0_i32_0 : i32
    scf.if %2 {
      %c0_48 = arith.constant 0 : index
      %c0_49 = arith.constant 0 : index
      %c0_50 = arith.constant 0 : index
      %85 = vector.load %arg3[%c0_48, %c0_49, %c0_50] : memref<1x8x32xf32, #tpu.memory_space<vmem>>, vector<1x8x32xf32>
      %86 = vector.shape_cast %85 : vector<1x8x32xf32> to vector<8x32xf32>
      %c0_51 = arith.constant 0 : index
      %c0_52 = arith.constant 0 : index
      %87 = vector.load %arg13[%c0_51, %c0_52] : memref<8x32xf32, #tpu.memory_space<vmem>>, vector<8x32xf32>
      tpu.vector_store %arg13[%c0_51, %c0_52], %86 {strides = array<i32>} : memref<8x32xf32, #tpu.memory_space<vmem>>, vector<8x32xf32>,
      %cst_53 = arith.constant 0.000000e+00 : f32
      %88 = vector.broadcast %cst_53 : f32 to vector<8x1xf32>
      %c0_54 = arith.constant 0 : index
      %c0_55 = arith.constant 0 : index
      %89 = vector.load %arg14[%c0_54, %c0_55] : memref<8x1xf32, #tpu.memory_space<vmem>>, vector<8x1xf32>
      tpu.vector_store %arg14[%c0_54, %c0_55], %88 {strides = array<i32>} : memref<8x1xf32, #tpu.memory_space<vmem>>, vector<8x1xf32>,
      %cst_56 = arith.constant 0.000000e+00 : f32
      %90 = vector.broadcast %cst_56 : f32 to vector<8x32xf32>
      %c0_57 = arith.constant 0 : index
      %c0_58 = arith.constant 0 : index
      %c0_59 = arith.constant 0 : index
      %91 = vector.load %arg10[%c0_57, %c0_58, %c0_59] : memref<1x8x32xf32, #tpu.memory_space<vmem>>, vector<1x8x32xf32>
      %92 = vector.shape_cast %91 : vector<1x8x32xf32> to vector<8x32xf32>
      %93 = vector.shape_cast %90 : vector<8x32xf32> to vector<1x8x32xf32>
      tpu.vector_store %arg10[%c0_57, %c0_58, %c0_59], %93 {strides = array<i32>} : memref<1x8x32xf32, #tpu.memory_space<vmem>>, vector<1x8x32xf32>,
      %cst_60 = arith.constant 0.000000e+00 : f32
      %94 = vector.broadcast %cst_60 : f32 to vector<8x1xf32>
      %c0_61 = arith.constant 0 : index
      %c0_62 = arith.constant 0 : index
      %c0_63 = arith.constant 0 : index
      %95 = vector.load %arg11[%c0_61, %c0_62, %c0_63] : memref<1x8x1xf32, #tpu.memory_space<vmem>>, vector<1x8x1xf32>
      %96 = vector.shape_cast %95 : vector<1x8x1xf32> to vector<8x1xf32>
      %97 = vector.shape_cast %94 : vector<8x1xf32> to vector<1x8x1xf32>
      tpu.vector_store %arg11[%c0_61, %c0_62, %c0_63], %97 {strides = array<i32>} : memref<1x8x1xf32, #tpu.memory_space<vmem>>, vector<1x8x1xf32>,
      %cst_64 = arith.constant 0.000000e+00 : f32
      %98 = vector.broadcast %cst_64 : f32 to vector<8x1xf32>
      %c0_65 = arith.constant 0 : index
      %c0_66 = arith.constant 0 : index
      %c0_67 = arith.constant 0 : index
      %99 = vector.load %arg12[%c0_65, %c0_66, %c0_67] : memref<1x8x1xf32, #tpu.memory_space<vmem>>, vector<1x8x1xf32>
      %100 = vector.shape_cast %99 : vector<1x8x1xf32> to vector<8x1xf32>
      %101 = vector.shape_cast %98 : vector<8x1xf32> to vector<1x8x1xf32>
      tpu.vector_store %arg12[%c0_65, %c0_66, %c0_67], %101 {strides = array<i32>} : memref<1x8x1xf32, #tpu.memory_space<vmem>>, vector<1x8x1xf32>,
    } else {
    }
    %c0 = arith.constant 0 : index
    %c0_1 = arith.constant 0 : index
    %3 = vector.load %arg13[%c0, %c0_1] : memref<8x32xf32, #tpu.memory_space<vmem>>, vector<8x32xf32>
    %c0_2 = arith.constant 0 : index
    %c0_3 = arith.constant 0 : index
    %c0_4 = arith.constant 0 : index
    %4 = vector.load %arg4[%c0_2, %c0_3, %c0_4] : memref<1x8x32xf32, #tpu.memory_space<vmem>>, vector<1x8x32xf32>
    %5 = vector.shape_cast %4 : vector<1x8x32xf32> to vector<8x32xf32>
    %6 = arith.addf %3, %5 : vector<8x32xf32>
    %c0_5 = arith.constant 0 : index
    %c0_6 = arith.constant 0 : index
    %c0_7 = arith.constant 0 : index
    %7 = vector.load %arg5[%c0_5, %c0_6, %c0_7] : memref<1x1x32xf32, #tpu.memory_space<vmem>>, vector<1x1x32xf32>
    %8 = vector.shape_cast %7 : vector<1x1x32xf32> to vector<1x32xf32>
    %9 = vector.broadcast %8 : vector<1x32xf32> to vector<8x32xf32>
    %10 = arith.addf %6, %9 : vector<8x32xf32>
    %c0_8 = arith.constant 0 : index
    %c0_9 = arith.constant 0 : index
    %11 = vector.load %arg6[%c0_8, %c0_9] : memref<1x32xf32, #tpu.memory_space<vmem>>, vector<1x32xf32>
    %12 = vector.broadcast %11 : vector<1x32xf32> to vector<8x32xf32>
    %13 = arith.mulf %10, %12 : vector<8x32xf32>
    %cst = arith.constant dense<0.000000e+00> : vector<8xf32>
    %14 = vector.multi_reduction <add>, %13, %cst [1] : vector<8x32xf32> to vector<8xf32>
    %15 = vector.shape_cast %14 : vector<8xf32> to vector<8x1xf32>
    %c0_10 = arith.constant 0 : index
    %c0_11 = arith.constant 0 : index
    %16 = vector.load %arg7[%c0_10, %c0_11] : memref<1x1xf32, #tpu.memory_space<vmem>>, vector<1x1xf32>
    %17 = vector.broadcast %16 : vector<1x1xf32> to vector<8x1xf32>
    %18 = arith.addf %15, %17 : vector<8x1xf32>
    %19 = arith.negf %18 : vector<8x1xf32>
    %20 = math.exp %19 : vector<8x1xf32>
    %cst_12 = arith.constant 1.000000e+00 : f32
    %21 = vector.broadcast %cst_12 : f32 to vector<8x1xf32>
    %22 = arith.addf %21, %20 : vector<8x1xf32>
    %23 = arith.divf %21, %22 : vector<8x1xf32>
    %c0_13 = arith.constant 0 : index
    %c0_14 = arith.constant 0 : index
    %24 = vector.load %arg14[%c0_13, %c0_14] : memref<8x1xf32, #tpu.memory_space<vmem>>, vector<8x1xf32>
    %c0_15 = arith.constant 0 : index
    %c0_16 = arith.constant 0 : index
    %c0_17 = arith.constant 0 : index
    %25 = vector.load %arg11[%c0_15, %c0_16, %c0_17] : memref<1x8x1xf32, #tpu.memory_space<vmem>>, vector<1x8x1xf32>
    %26 = vector.shape_cast %25 : vector<1x8x1xf32> to vector<8x1xf32>
    %c0_18 = arith.constant 0 : index
    %c0_19 = arith.constant 0 : index
    %c0_20 = arith.constant 0 : index
    %27 = vector.load %arg12[%c0_18, %c0_19, %c0_20] : memref<1x8x1xf32, #tpu.memory_space<vmem>>, vector<1x8x1xf32>
    %28 = vector.shape_cast %27 : vector<1x8x1xf32> to vector<8x1xf32>
    %cst_21 = arith.constant 1.000000e+00 : f32
    %29 = vector.broadcast %cst_21 : f32 to vector<8x1xf32>
    %30 = arith.cmpf olt, %24, %29 : vector<8x1xf32>
    %31 = arith.extui %30 : vector<8x1xi1> to vector<8x1xi32>
    %32 = arith.sitofp %31 : vector<8x1xi32> to vector<8x1xf32>
    %33 = arith.mulf %23, %32 : vector<8x1xf32>
    %34 = arith.addf %24, %33 : vector<8x1xf32>
    %cst_22 = arith.constant 0.899999976 : f32
    %35 = vector.broadcast %cst_22 : f32 to vector<8x1xf32>
    %36 = arith.cmpf ogt, %34, %35 : vector<8x1xf32>
    %37 = arith.extui %36 : vector<8x1xi1> to vector<8x1xi32>
    %38 = arith.sitofp %37 : vector<8x1xi32> to vector<8x1xf32>
    %39 = arith.mulf %38, %32 : vector<8x1xf32>
    %cst_23 = arith.constant 0.899999976 : f32
    %40 = vector.broadcast %cst_23 : f32 to vector<8x1xf32>
    %41 = arith.cmpf ole, %34, %40 : vector<8x1xf32>
    %42 = arith.extui %41 : vector<8x1xi1> to vector<8x1xi32>
    %43 = arith.sitofp %42 : vector<8x1xi32> to vector<8x1xf32>
    %44 = arith.mulf %43, %32 : vector<8x1xf32>
    %45 = arith.mulf %23, %44 : vector<8x1xf32>
    %46 = arith.addf %24, %45 : vector<8x1xf32>
    %cst_24 = arith.constant 1.000000e+00 : f32
    %47 = vector.broadcast %cst_24 : f32 to vector<8x1xf32>
    %48 = arith.subf %47, %46 : vector<8x1xf32>
    %49 = arith.mulf %39, %48 : vector<8x1xf32>
    %50 = arith.addf %26, %49 : vector<8x1xf32>
    %51 = arith.mulf %39, %50 : vector<8x1xf32>
    %52 = arith.addf %46, %51 : vector<8x1xf32>
    %53 = arith.addf %28, %44 : vector<8x1xf32>
    %54 = arith.addf %53, %39 : vector<8x1xf32>
    %55 = arith.mulf %23, %44 : vector<8x1xf32>
    %56 = arith.mulf %39, %50 : vector<8x1xf32>
    %57 = arith.addf %55, %56 : vector<8x1xf32>
    %c0_25 = arith.constant 0 : index
    %c0_26 = arith.constant 0 : index
    %58 = vector.load %arg8[%c0_25, %c0_26] : memref<32x32xf32, #tpu.memory_space<vmem>>, vector<32x32xf32>
    %cst_27 = arith.constant dense<0.000000e+00> : vector<8x32xf32>
    %59 = tpu.matmul %10, %58, %cst_27 {dimension_numbers = #tpu.dot_dimension_numbers<[1], [0], [0], [1], [0, 0, 1, 1], [], []>} : vector<8x32xf32>, vector<32x32xf32>, vector<8x32xf32> -> vector<8x32xf32>
    %c0_28 = arith.constant 0 : index
    %c0_29 = arith.constant 0 : index
    %60 = vector.load %arg9[%c0_28, %c0_29] : memref<1x32xf32, #tpu.memory_space<vmem>>, vector<1x32xf32>
    %61 = vector.broadcast %60 : vector<1x32xf32> to vector<8x32xf32>
    %62 = arith.addf %59, %61 : vector<8x32xf32>
    %cst_30 = arith.constant 0.000000e+00 : f32
    %63 = vector.broadcast %cst_30 : f32 to vector<8x32xf32>
    %64 = arith.maximumf %62, %63 : vector<8x32xf32>
    %65 = vector.broadcast %57 : vector<8x1xf32> to vector<8x32xf32>
    %66 = arith.mulf %64, %65 : vector<8x32xf32>
    %c0_31 = arith.constant 0 : index
    %c0_32 = arith.constant 0 : index
    %c0_33 = arith.constant 0 : index
    %67 = vector.load %arg10[%c0_31, %c0_32, %c0_33] : memref<1x8x32xf32, #tpu.memory_space<vmem>>, vector<1x8x32xf32>
    %68 = vector.shape_cast %67 : vector<1x8x32xf32> to vector<8x32xf32>
    %cst_34 = arith.constant 1.000000e+00 : f32
    %69 = vector.broadcast %cst_34 : f32 to vector<8x1xf32>
    %70 = arith.subf %69, %57 : vector<8x1xf32>
    %71 = vector.broadcast %70 : vector<8x1xf32> to vector<8x32xf32>
    %72 = arith.mulf %68, %71 : vector<8x32xf32>
    %73 = arith.addf %66, %72 : vector<8x32xf32>
    %c0_35 = arith.constant 0 : index
    %c0_36 = arith.constant 0 : index
    %c0_37 = arith.constant 0 : index
    %74 = vector.load %arg10[%c0_35, %c0_36, %c0_37] : memref<1x8x32xf32, #tpu.memory_space<vmem>>, vector<1x8x32xf32>
    %75 = vector.shape_cast %74 : vector<1x8x32xf32> to vector<8x32xf32>
    %76 = vector.shape_cast %73 : vector<8x32xf32> to vector<1x8x32xf32>
    tpu.vector_store %arg10[%c0_35, %c0_36, %c0_37], %76 {strides = array<i32>} : memref<1x8x32xf32, #tpu.memory_space<vmem>>, vector<1x8x32xf32>,
    %c0_38 = arith.constant 0 : index
    %c0_39 = arith.constant 0 : index
    %c0_40 = arith.constant 0 : index
    %77 = vector.load %arg11[%c0_38, %c0_39, %c0_40] : memref<1x8x1xf32, #tpu.memory_space<vmem>>, vector<1x8x1xf32>
    %78 = vector.shape_cast %77 : vector<1x8x1xf32> to vector<8x1xf32>
    %79 = vector.shape_cast %50 : vector<8x1xf32> to vector<1x8x1xf32>
    tpu.vector_store %arg11[%c0_38, %c0_39, %c0_40], %79 {strides = array<i32>} : memref<1x8x1xf32, #tpu.memory_space<vmem>>, vector<1x8x1xf32>,
    %c0_41 = arith.constant 0 : index
    %c0_42 = arith.constant 0 : index
    %c0_43 = arith.constant 0 : index
    %80 = vector.load %arg12[%c0_41, %c0_42, %c0_43] : memref<1x8x1xf32, #tpu.memory_space<vmem>>, vector<1x8x1xf32>
    %81 = vector.shape_cast %80 : vector<1x8x1xf32> to vector<8x1xf32>
    %82 = vector.shape_cast %54 : vector<8x1xf32> to vector<1x8x1xf32>
    tpu.vector_store %arg12[%c0_41, %c0_42, %c0_43], %82 {strides = array<i32>} : memref<1x8x1xf32, #tpu.memory_space<vmem>>, vector<1x8x1xf32>,
    %c0_44 = arith.constant 0 : index
    %c0_45 = arith.constant 0 : index
    %83 = vector.load %arg13[%c0_44, %c0_45] : memref<8x32xf32, #tpu.memory_space<vmem>>, vector<8x32xf32>
    tpu.vector_store %arg13[%c0_44, %c0_45], %64 {strides = array<i32>} : memref<8x32xf32, #tpu.memory_space<vmem>>, vector<8x32xf32>,
    %c0_46 = arith.constant 0 : index
    %c0_47 = arith.constant 0 : index
    %84 = vector.load %arg14[%c0_46, %c0_47] : memref<8x1xf32, #tpu.memory_space<vmem>>, vector<8x1xf32>
    tpu.vector_store %arg14[%c0_46, %c0_47], %52 {strides = array<i32>} : memref<8x1xf32, #tpu.memory_space<vmem>>, vector<8x1xf32>,
    return
  }
  func.func @transform_0(%arg0: i32, %arg1: i32, %arg2: i32) -> (i32, i32, i32) {
    %c0_i32 = arith.constant 0 : i32
    %c0_i32_0 = arith.constant 0 : i32
    return %arg0, %arg1, %c0_i32 : i32, i32, i32
  }
  func.func @transform_1(%arg0: i32, %arg1: i32, %arg2: i32) -> (i32, i32, i32) {
    %c0_i32 = arith.constant 0 : i32
    %c0_i32_0 = arith.constant 0 : i32
    %c0_i32_1 = arith.constant 0 : i32
    return %c0_i32, %arg1, %c0_i32_0 : i32, i32, i32
  }
  func.func @transform_2(%arg0: i32, %arg1: i32, %arg2: i32) -> (i32, i32, i32) {
    %c0_i32 = arith.constant 0 : i32
    %c0_i32_0 = arith.constant 0 : i32
    %c0_i32_1 = arith.constant 0 : i32
    return %arg2, %c0_i32, %c0_i32_0 : i32, i32, i32
  }
  func.func @transform_3(%arg0: i32, %arg1: i32, %arg2: i32) -> (i32, i32) {
    %c0_i32 = arith.constant 0 : i32
    %c0_i32_0 = arith.constant 0 : i32
    %c0_i32_1 = arith.constant 0 : i32
    return %c0_i32, %c0_i32_0 : i32, i32
  }
  func.func @transform_4(%arg0: i32, %arg1: i32, %arg2: i32) -> (i32, i32) {
    %c0_i32 = arith.constant 0 : i32
    %c0_i32_0 = arith.constant 0 : i32
    %c0_i32_1 = arith.constant 0 : i32
    return %c0_i32, %c0_i32_0 : i32, i32
  }
  func.func @transform_5(%arg0: i32, %arg1: i32, %arg2: i32) -> (i32, i32) {
    %c0_i32 = arith.constant 0 : i32
    %c0_i32_0 = arith.constant 0 : i32
    %c0_i32_1 = arith.constant 0 : i32
    return %c0_i32, %c0_i32_0 : i32, i32
  }
  func.func @transform_6(%arg0: i32, %arg1: i32, %arg2: i32) -> (i32, i32) {
    %c0_i32 = arith.constant 0 : i32
    %c0_i32_0 = arith.constant 0 : i32
    %c0_i32_1 = arith.constant 0 : i32
    return %c0_i32, %c0_i32_0 : i32, i32
  }
  func.func @transform_7(%arg0: i32, %arg1: i32, %arg2: i32) -> (i32, i32, i32) {
    %c0_i32 = arith.constant 0 : i32
    %c0_i32_0 = arith.constant 0 : i32
    return %arg0, %arg1, %c0_i32 : i32, i32, i32
  }
  func.func @transform_8(%arg0: i32, %arg1: i32, %arg2: i32) -> (i32, i32, i32) {
    %c0_i32 = arith.constant 0 : i32
    %c0_i32_0 = arith.constant 0 : i32
    return %arg0, %arg1, %c0_i32 : i32, i32, i32
  }
  func.func @transform_9(%arg0: i32, %arg1: i32, %arg2: i32) -> (i32, i32, i32) {
    %c0_i32 = arith.constant 0 : i32
    %c0_i32_0 = arith.constant 0 : i32
    return %arg0, %arg1, %c0_i32 : i32, i32, i32
  }
}

</mosaic_0001>

<llo_original>
// kernel: tpu_custom_call.1
$region0: #{tpu_custom_call.1}
  #allocation0 [shape = 'u32[]', space=smem, size = 0x4, offset = 0x4, fixed_abs, tag = 'smem constant byte address 0x4 - core index']
  #allocation1 [shape = 'u32[144,128]{1,0:T(1,128)}', space=vmem, size = 0x12000, scoped, tag = 'internal scratch']
  #allocation2 [shape = 'f32[8,32]{1,0:T(8,128)}', space=vmem, size = 0x1000, scoped, tag = 'scratch operand']
  #allocation3 [shape = 'f32[8,1]{1,0:T(8,128)}', space=vmem, size = 0x1000, scoped, tag = 'scratch operand']
  #allocation4 [shape = 'f32[1,1]{1,0:T(1,128)S(1)}', space=vmem, size = 0x200, scoped, tag = 'scoped memory for tpu_custom_call.1']
  %s0 = inlined_call_operand.hbm [shape: f32[2,8,32], index: 0, kind: input, shape index: {}]
  %s1 = inlined_call_operand.hbm [shape: f32[1,8,32], index: 1, kind: input, shape index: {}]
  %s2 = inlined_call_operand.vmem [shape: f32[4,1,32], index: 2, kind: input, shape index: {}]
  %s3 = inlined_call_operand.vmem [shape: f32[1,32], index: 3, kind: input, shape index: {}]
  %s4 = inlined_call_operand.<no memory space> [shape: f32[1,1], index: 4, kind: input, shape index: {}]
  %s5 = inlined_call_operand.hbm [shape: f32[32,32], index: 5, kind: input, shape index: {}]
  %s6 = inlined_call_operand.vmem [shape: f32[1,32], index: 6, kind: input, shape index: {}]
  %s7 = inlined_call_operand.hbm [shape: f32[2,8,32], index: 7, kind: output, shape index: {0}]
  %s8 = inlined_call_operand.vmem [shape: f32[2,8,1], index: 8, kind: output, shape index: {1}]
  %s9 = inlined_call_operand.vmem [shape: f32[2,8,1], index: 9, kind: output, shape index: {2}]
  %10 = xla_tuple %s7, %s8, %s9
  %s11 = sld [smem:[#allocation0]]
  $region93: #{tpu_custom_call.1} parent=0
    _
  %s13 = ssub.s32 1, %s11
  %s14 = scalar_select 0, %s13, %s11
  %v15 = vstv %s4
  %16 = vst [vmem:[#allocation4] sm:$0x1] %v15
  $region1: #{tpu_custom_call.1} parent=0
    #allocation5 [shape = 'u8[8192]{0}', space=vmem, size = 0x2000, scoped, tag = 'input window, operand 0']
    #allocation6 [shape = 's32[2]{0}', space=sflag, size = 0x8, scoped, tag = 'scoped memory for tpu_custom_call.1']
    #allocation7 [shape = 's32[2]{0}', space=sflag, size = 0x8, scoped, tag = 'scoped memory for tpu_custom_call.1']
    #allocation8 [shape = 'u8[4096]{0}', space=vmem, size = 0x1000, scoped, tag = 'input window, operand 1, single buffered']
    #allocation9 [shape = 's32[1]{0}', space=sflag, size = 0x4, scoped, tag = 'scoped memory for tpu_custom_call.1']
    #allocation10 [shape = 'u8[16384]{0}', space=vmem, size = 0x4000, scoped, tag = 'input window, operand 5, single buffered']
    #allocation11 [shape = 'u8[8192]{0}', space=vmem, size = 0x2000, scoped, tag = 'output window, operand 0']
    %17 = vsyncpa [#allocation6], 0
    %s18 = scalar_lea.sflag [#allocation6], 1
    %19 = vsyncpa %s18, 0
    %20 = vsyncpa [#allocation9], 0
    %21 = vsyncpa [#allocation7], 0
    %s22 = scalar_lea.sflag [#allocation7], 1
    %23 = vsyncpa %s22, 0
    loop: start=0, step=1, limit=10
    $region2: #{tpu_custom_call.1} parent=1 // loop_pre_header
      _
    $region3: #{tpu_custom_call.1} parent=1 // loop_header
      %s25 = sphi 0, %s29
      %p26 = scmp.ge.s32.totalorder %s25, 10
      %s32 = sphi 0, %s51
      %s33 = sphi 0, %s47
      %s34 = sphi 0, %s43
      %s35 = sphi 0, %s32
      %s36 = sphi 0, %s33
      %s37 = sphi 0, %s34
      %s38 = sphi 0, %s35
      %s39 = sphi 0, %s36
      %s40 = sphi 0, %s37
      %s56 = sphi 0, %s58
      %s59 = sphi 0, %s56
      %s60 = sphi 0, %s59
      %s76 = sphi 0, %s60
      %s82 = sphi 0, %s84
      %s85 = sphi 0, %s82
      %s86 = sphi 0, %s85
      %s102 = sphi 0, %s86
      %s108 = sphi 0, %s110
      %s111 = sphi 0, %s108
      %s112 = sphi 0, %s111
      %s128 = sphi 0, %s112
      %s132 = sphi 0, %s132
      %s134 = sphi 0, %s132
      %s135 = sphi 0, %s134
      %s149 = sphi 0, %s135
      %s153 = sphi 0, %s153
      %s155 = sphi 0, %s153
      %s156 = sphi 0, %s155
      %s170 = sphi 0, %s156
      %s174 = sphi 0, %s174
      %s176 = sphi 0, %s174
      %s177 = sphi 0, %s176
      %s191 = sphi 0, %s177
      %s195 = sphi 0, %s195
      %s197 = sphi 0, %s195
      %s198 = sphi 0, %s197
      %s212 = sphi 0, %s198
      %s220 = sphi 0, %s222
      %s223 = sphi 0, %s220
      %s224 = sphi 0, %s223
      %s240 = sphi 0, %s224
      %s248 = sphi 0, %s250
      %s251 = sphi 0, %s248
      %s252 = sphi 0, %s251
      %s268 = sphi 0, %s252
      %s276 = sphi 0, %s278
      %s279 = sphi 0, %s276
      %s280 = sphi 0, %s279
      %s296 = sphi 0, %s280
    $region4: #{tpu_custom_call.1} parent=1 // loop_header_branch
      %28 = sbr.rel (%p26) target = $region8
    $region5: #{tpu_custom_call.1} parent=1 // loop_body
      %s30 = ssub.s32 %s25, 1
      %s31 = ssub.s32 %s25, 2
      %s41 = sadd.s32 1, %s34
      %p42 = scmp.ge.s32.totalorder %s41, 4
      %s43 = scalar_select %p42, 0, %s41
      %s44 = sadd.s32 1, %s33
      %s45 = scalar_select %p42, %s44, %s33
      %p46 = scmp.ge.s32.totalorder %s45, 1
      %s47 = scalar_select %p46, 0, %s45
      %s48 = sadd.s32 1, %s32
      %s49 = scalar_select %p46, %s48, %s32
      %p50 = scmp.ge.s32.totalorder %s49, 2
      %s51 = scalar_select %p50, 0, %s49
      %s52 = ssub.s32 %s32, %s51
      %s53 = ssub.s32 %s33, %s47
      %s54 = sor.u32 %s52, %s53
      %p55 = scmp.eq.s32.totalorder %s54, 0
      %s57 = sadd.s32 %s56, 1
      %s58 = scalar_select %p55, %s56, %s57
      %p61 = pneg %p55
      %p62 = scmp.eq.s32.totalorder %s25, 7
      %p63 = por %p61, %p62
      %p64 = scmp.ne.s32.totalorder %s56, %s59
      %p65 = scmp.eq.s32.totalorder %s25, 0
      %p66 = por %p64, %p65
      %p67 = scmp.ne.s32.totalorder %s56, %s59
      %p68 = scmp.eq.s32.totalorder %s30, 7
      %p69 = por %p67, %p68
      %p70 = scmp.ne.s32.totalorder %s59, %s60
      %p71 = scmp.eq.s32.totalorder %s30, 0
      %p72 = por %p70, %p71
      %p73 = scmp.ne.s32.totalorder %s59, %s60
      %p74 = scmp.eq.s32.totalorder %s31, 7
      %p75 = por %p73, %p74
      %p77 = scmp.ne.s32.totalorder %s60, %s76
      %p78 = scmp.eq.s32.totalorder %s31, 0
      %p79 = por %p77, %p78
      %s80 = ssub.s32 %s33, %s47
      %p81 = scmp.eq.s32.totalorder %s80, 0
      %s83 = sadd.s32 %s82, 1
      %s84 = scalar_select %p81, %s82, %s83
      %p87 = pneg %p81
      %p88 = scmp.eq.s32.totalorder %s25, 7
      %p89 = por %p87, %p88
      %p90 = scmp.ne.s32.totalorder %s82, %s85
      %p91 = scmp.eq.s32.totalorder %s25, 0
      %p92 = por %p90, %p91
      %p93 = scmp.ne.s32.totalorder %s82, %s85
      %p94 = scmp.eq.s32.totalorder %s30, 7
      %p95 = por %p93, %p94
      %p96 = scmp.ne.s32.totalorder %s85, %s86
      %p97 = scmp.eq.s32.totalorder %s30, 0
      %p98 = por %p96, %p97
      %p99 = scmp.ne.s32.totalorder %s85, %s86
      %p100 = scmp.eq.s32.totalorder %s31, 7
      %p101 = por %p99, %p100
      %p103 = scmp.ne.s32.totalorder %s86, %s102
      %p104 = scmp.eq.s32.totalorder %s31, 0
      %p105 = por %p103, %p104
      %s106 = ssub.s32 %s34, %s43
      %p107 = scmp.eq.s32.totalorder %s106, 0
      %s109 = sadd.s32 %s108, 1
      %s110 = scalar_select %p107, %s108, %s109
      %p113 = pneg %p107
      %p114 = scmp.eq.s32.totalorder %s25, 7
      %p115 = por %p113, %p114
      %p116 = scmp.ne.s32.totalorder %s108, %s111
      %p117 = scmp.eq.s32.totalorder %s25, 0
      %p118 = por %p116, %p117
      %p119 = scmp.ne.s32.totalorder %s108, %s111
      %p120 = scmp.eq.s32.totalorder %s30, 7
      %p121 = por %p119, %p120
      %p122 = scmp.ne.s32.totalorder %s111, %s112
      %p123 = scmp.eq.s32.totalorder %s30, 0
      %p124 = por %p122, %p123
      %p125 = scmp.ne.s32.totalorder %s111, %s112
      %p126 = scmp.eq.s32.totalorder %s31, 7
      %p127 = por %p125, %p126
      %p129 = scmp.ne.s32.totalorder %s112, %s128
      %p130 = scmp.eq.s32.totalorder %s31, 0
      %p131 = por %p129, %p130
      %s133 = sadd.s32 %s132, 1
      %p136 = scmp.eq.s32.totalorder %s25, 7
      %p137 = scmp.ne.s32.totalorder %s132, %s134
      %p138 = scmp.eq.s32.totalorder %s25, 0
      %p139 = por %p137, %p138
      %p140 = scmp.ne.s32.totalorder %s132, %s134
      %p141 = scmp.eq.s32.totalorder %s30, 7
      %p142 = por %p140, %p141
      %p143 = scmp.ne.s32.totalorder %s134, %s135
      %p144 = scmp.eq.s32.totalorder %s30, 0
      %p145 = por %p143, %p144
      %p146 = scmp.ne.s32.totalorder %s134, %s135
      %p147 = scmp.eq.s32.totalorder %s31, 7
      %p148 = por %p146, %p147
      %p150 = scmp.ne.s32.totalorder %s135, %s149
      %p151 = scmp.eq.s32.totalorder %s31, 0
      %p152 = por %p150, %p151
      %s154 = sadd.s32 %s153, 1
      %p157 = scmp.eq.s32.totalorder %s25, 7
      %p158 = scmp.ne.s32.totalorder %s153, %s155
      %p159 = scmp.eq.s32.totalorder %s25, 0
      %p160 = por %p158, %p159
      %p161 = scmp.ne.s32.totalorder %s153, %s155
      %p162 = scmp.eq.s32.totalorder %s30, 7
      %p163 = por %p161, %p162
      %p164 = scmp.ne.s32.totalorder %s155, %s156
      %p165 = scmp.eq.s32.totalorder %s30, 0
      %p166 = por %p164, %p165
      %p167 = scmp.ne.s32.totalorder %s155, %s156
      %p168 = scmp.eq.s32.totalorder %s31, 7
      %p169 = por %p167, %p168
      %p171 = scmp.ne.s32.totalorder %s156, %s170
      %p172 = scmp.eq.s32.totalorder %s31, 0
      %p173 = por %p171, %p172
      %s175 = sadd.s32 %s174, 1
      %p178 = scmp.eq.s32.totalorder %s25, 7
      %p179 = scmp.ne.s32.totalorder %s174, %s176
      %p180 = scmp.eq.s32.totalorder %s25, 0
      %p181 = por %p179, %p180
      %p182 = scmp.ne.s32.totalorder %s174, %s176
      %p183 = scmp.eq.s32.totalorder %s30, 7
      %p184 = por %p182, %p183
      %p185 = scmp.ne.s32.totalorder %s176, %s177
      %p186 = scmp.eq.s32.totalorder %s30, 0
      %p187 = por %p185, %p186
      %p188 = scmp.ne.s32.totalorder %s176, %s177
      %p189 = scmp.eq.s32.totalorder %s31, 7
      %p190 = por %p188, %p189
      %p192 = scmp.ne.s32.totalorder %s177, %s191
      %p193 = scmp.eq.s32.totalorder %s31, 0
      %p194 = por %p192, %p193
      %s196 = sadd.s32 %s195, 1
      %p199 = scmp.eq.s32.totalorder %s25, 7
      %p200 = scmp.ne.s32.totalorder %s195, %s197
      %p201 = scmp.eq.s32.totalorder %s25, 0
      %p202 = por %p200, %p201
      %p203 = scmp.ne.s32.totalorder %s195, %s197
      %p204 = scmp.eq.s32.totalorder %s30, 7
      %p205 = por %p203, %p204
      %p206 = scmp.ne.s32.totalorder %s197, %s198
      %p207 = scmp.eq.s32.totalorder %s30, 0
      %p208 = por %p206, %p207
      %p209 = scmp.ne.s32.totalorder %s197, %s198
      %p210 = scmp.eq.s32.totalorder %s31, 7
      %p211 = por %p209, %p210
      %p213 = scmp.ne.s32.totalorder %s198, %s212
      %p214 = scmp.eq.s32.totalorder %s31, 0
      %p215 = por %p213, %p214
      %s216 = ssub.s32 %s32, %s51
      %s217 = ssub.s32 %s33, %s47
      %s218 = sor.u32 %s216, %s217
      %p219 = scmp.eq.s32.totalorder %s218, 0
      %s221 = sadd.s32 %s220, 1
      %s222 = scalar_select %p219, %s220, %s221
      %p225 = pneg %p219
      %p226 = scmp.eq.s32.totalorder %s25, 7
      %p227 = por %p225, %p226
      %p228 = scmp.ne.s32.totalorder %s220, %s223
      %p229 = scmp.eq.s32.totalorder %s25, 0
      %p230 = por %p228, %p229
      %p231 = scmp.ne.s32.totalorder %s220, %s223
      %p232 = scmp.eq.s32.totalorder %s30, 7
      %p233 = por %p231, %p232
      %p234 = scmp.ne.s32.totalorder %s223, %s224
      %p235 = scmp.eq.s32.totalorder %s30, 0
      %p236 = por %p234, %p235
      %p237 = scmp.ne.s32.totalorder %s223, %s224
      %p238 = scmp.eq.s32.totalorder %s31, 7
      %p239 = por %p237, %p238
      %p241 = scmp.ne.s32.totalorder %s224, %s240
      %p242 = scmp.eq.s32.totalorder %s31, 0
      %p243 = por %p241, %p242
      %s244 = ssub.s32 %s32, %s51
      %s245 = ssub.s32 %s33, %s47
      %s246 = sor.u32 %s244, %s245
      %p247 = scmp.eq.s32.totalorder %s246, 0
      %s249 = sadd.s32 %s248, 1
      %s250 = scalar_select %p247, %s248, %s249
      %p253 = pneg %p247
      %p254 = scmp.eq.s32.totalorder %s25, 7
      %p255 = por %p253, %p254
      %p256 = scmp.ne.s32.totalorder %s248, %s251
      %p257 = scmp.eq.s32.totalorder %s25, 0
      %p258 = por %p256, %p257
      %p259 = scmp.ne.s32.totalorder %s248, %s251
      %p260 = scmp.eq.s32.totalorder %s30, 7
      %p261 = por %p259, %p260
      %p262 = scmp.ne.s32.totalorder %s251, %s252
      %p263 = scmp.eq.s32.totalorder %s30, 0
      %p264 = por %p262, %p263
      %p265 = scmp.ne.s32.totalorder %s251, %s252
      %p266 = scmp.eq.s32.totalorder %s31, 7
      %p267 = por %p265, %p266
      %p269 = scmp.ne.s32.totalorder %s252, %s268
      %p270 = scmp.eq.s32.totalorder %s31, 0
      %p271 = por %p269, %p270
      %s272 = ssub.s32 %s32, %s51
      %s273 = ssub.s32 %s33, %s47
      %s274 = sor.u32 %s272, %s273
      %p275 = scmp.eq.s32.totalorder %s274, 0
      %s277 = sadd.s32 %s276, 1
      %s278 = scalar_select %p275, %s276, %s277
      %p281 = pneg %p275
      %p282 = scmp.eq.s32.totalorder %s25, 7
      %p283 = por %p281, %p282
      %p284 = scmp.ne.s32.totalorder %s276, %s279
      %p285 = scmp.eq.s32.totalorder %s25, 0
      %p286 = por %p284, %p285
      %p287 = scmp.ne.s32.totalorder %s276, %s279
      %p288 = scmp.eq.s32.totalorder %s30, 7
      %p289 = por %p287, %p288
      %p290 = scmp.ne.s32.totalorder %s279, %s280
      %p291 = scmp.eq.s32.totalorder %s30, 0
      %p292 = por %p290, %p291
      %p293 = scmp.ne.s32.totalorder %s279, %s280
      %p294 = scmp.eq.s32.totalorder %s31, 7
      %p295 = por %p293, %p294
      %p297 = scmp.ne.s32.totalorder %s280, %s296
      %p298 = scmp.eq.s32.totalorder %s31, 0
      %p299 = por %p297, %p298
      %p300 = scmp.le.s32.totalorder 1, %s25
      %p301 = scmp.lt.s32.totalorder %s25, 9
      %p302 = pnand %p300, %p301
      %p303 = pneg %p302
      // Predicated region
      $region9: #{tpu_custom_call.1} parent=5 // pred_check
        _
      $region10: #{tpu_custom_call.1} parent=5 // pred_check_branch
        %305 = sbr.rel (%p302) target = $region12
      $region11: #{tpu_custom_call.1} parent=5 // pred_region
        %s306 = ssub.s32 %s25, 1
        // Predicated region
        $region13: #{tpu_custom_call.1} parent=11 // pred_check
          %p307 = pneg %p98
        $region14: #{tpu_custom_call.1} parent=11 // pred_check_branch
          %309 = sbr.rel (%p307) target = $region16
        $region15: #{tpu_custom_call.1} parent=11 // pred_region
          %s311 = ssub.s32 128, 128
          %312 = vsyncadd [#allocation9], %s311
          %s313 = smul.addr %s36, 128
          %s314 = scalar_lea.hbm %s1, %s313
          %s316 = sshll.u32 [#allocation8], 4
          %s317 = int_to_ptr.vmem [resolvable:$true] %s316
          %319 = dma.hbm_to_vmem [thread:$0]  %s314, 128, %s317, [#allocation9]
        $region16: #{tpu_custom_call.1} parent=11 // pred_fallthru
          _
        // Predicated region
        $region17: #{tpu_custom_call.1} parent=11 // pred_check
          %p320 = pneg %p145
        $region18: #{tpu_custom_call.1} parent=11 // pred_check_branch
          %322 = sbr.rel (%p320) target = $region20
        $region19: #{tpu_custom_call.1} parent=11 // pred_region
          _
        $region20: #{tpu_custom_call.1} parent=11 // pred_fallthru
          _
        // Predicated region
        $region21: #{tpu_custom_call.1} parent=11 // pred_check
          %p323 = pneg %p166
        $region22: #{tpu_custom_call.1} parent=11 // pred_check_branch
          %325 = sbr.rel (%p323) target = $region24
        $region23: #{tpu_custom_call.1} parent=11 // pred_region
          _
        $region24: #{tpu_custom_call.1} parent=11 // pred_fallthru
          _
        // Predicated region
        $region25: #{tpu_custom_call.1} parent=11 // pred_check
          %p326 = pneg %p187
        $region26: #{tpu_custom_call.1} parent=11 // pred_check_branch
          %328 = sbr.rel (%p326) target = $region28
        $region27: #{tpu_custom_call.1} parent=11 // pred_region
          %s330 = ssub.s32 512, 512
          %331 = vsyncadd [#allocation9], %s330
          %s332 = sshll.u32 [#allocation10], 4
          %s333 = int_to_ptr.vmem [resolvable:$true] %s332
          %338 = dma.hbm_to_vmem [thread:$0]  %s5, 512, %s333, [#allocation9], 128, 128, 8
        $region28: #{tpu_custom_call.1} parent=11 // pred_fallthru
          _
        // Predicated region
        $region29: #{tpu_custom_call.1} parent=11 // pred_check
          %p339 = pneg %p208
        $region30: #{tpu_custom_call.1} parent=11 // pred_check_branch
          %341 = sbr.rel (%p339) target = $region32
        $region31: #{tpu_custom_call.1} parent=11 // pred_region
          _
        $region32: #{tpu_custom_call.1} parent=11 // pred_fallthru
          _
      $region12: #{tpu_custom_call.1} parent=5 // pred_fallthru
        _
      %p342 = scmp.lt.s32.totalorder %s25, 8
      // Predicated region
      $region33: #{tpu_custom_call.1} parent=5 // pred_check
        %p343 = pneg %p342
      $region34: #{tpu_custom_call.1} parent=5 // pred_check_branch
        %345 = sbr.rel (%p343) target = $region36
      $region35: #{tpu_custom_call.1} parent=5 // pred_region
        // Predicated region
        $region37: #{tpu_custom_call.1} parent=35 // pred_check
          %p346 = pneg %p66
        $region38: #{tpu_custom_call.1} parent=35 // pred_check_branch
          %348 = sbr.rel (%p346) target = $region40
        $region39: #{tpu_custom_call.1} parent=35 // pred_region
          %s349 = sand.u32 %s56, 1
          %s350 = scalar_lea.sflag [#allocation6], %s349
          %s351 = sand.u32 %s56, 1
          %s352 = smul.addr %s351, 8
          %s353 = scalar_lea.vmem [#allocation5], %s352
          %s355 = ssub.s32 128, 128
          %356 = vsyncadd %s350, %s355
          %s357 = sadd.s32 %s33, %s32
          %s358 = smul.addr %s357, 128
          %s359 = scalar_lea.hbm %s0, %s358
          %s361 = sshll.u32 %s353, 4
          %s362 = int_to_ptr.vmem [resolvable:$true] %s361
          %364 = dma.hbm_to_vmem [thread:$0]  %s359, 128, %s362, %s350
        $region40: #{tpu_custom_call.1} parent=35 // pred_fallthru
          _
        // Predicated region
        $region41: #{tpu_custom_call.1} parent=35 // pred_check
          %p365 = pneg %p118
        $region42: #{tpu_custom_call.1} parent=35 // pred_check_branch
          %367 = sbr.rel (%p365) target = $region44
        $region43: #{tpu_custom_call.1} parent=35 // pred_region
          %p368 = scmp.lt.s32.totalorder %s34, 3
          %s369 = scalar_select %p368, %s34, 3
          %s370 = scalar_lea.vmem %s2, %s369
        $region44: #{tpu_custom_call.1} parent=35 // pred_fallthru
          _
      $region36: #{tpu_custom_call.1} parent=5 // pred_fallthru
        _
      %p371 = scmp.le.s32.totalorder 1, %s25
      %p372 = scmp.lt.s32.totalorder %s25, 9
      %p373 = pnand %p371, %p372
      %p374 = pneg %p373
      // Predicated region
      $region45: #{tpu_custom_call.1} parent=5 // pred_check
        _
      $region46: #{tpu_custom_call.1} parent=5 // pred_check_branch
        %376 = sbr.rel (%p373) target = $region48
      $region47: #{tpu_custom_call.1} parent=5 // pred_region
        %s377 = ssub.s32 %s25, 1
        %s378 = sand.u32 %s59, 1
        %s379 = scalar_lea.sflag [#allocation6], %s378
        %s380 = sand.u32 %s59, 1
        %s381 = smul.addr %s380, 8
        %s382 = scalar_lea.vmem [#allocation5], %s381
        // Predicated region
        $region49: #{tpu_custom_call.1} parent=47 // pred_check
          %p383 = pneg %p72
        $region50: #{tpu_custom_call.1} parent=47 // pred_check_branch
          %385 = sbr.rel (%p383) target = $region52
        $region51: #{tpu_custom_call.1} parent=47 // pred_region
          %386 = dma.done %s379, 128
        $region52: #{tpu_custom_call.1} parent=47 // pred_fallthru
          _
        // Predicated region
        $region53: #{tpu_custom_call.1} parent=47 // pred_check
          %p387 = pneg %p98
        $region54: #{tpu_custom_call.1} parent=47 // pred_check_branch
          %389 = sbr.rel (%p387) target = $region56
        $region55: #{tpu_custom_call.1} parent=47 // pred_region
          %390 = dma.done [#allocation9], 128
        $region56: #{tpu_custom_call.1} parent=47 // pred_fallthru
          _
        // Predicated region
        $region57: #{tpu_custom_call.1} parent=47 // pred_check
          %p391 = pneg %p187
        $region58: #{tpu_custom_call.1} parent=47 // pred_check_branch
          %393 = sbr.rel (%p391) target = $region60
        $region59: #{tpu_custom_call.1} parent=47 // pred_region
          %394 = dma.done [#allocation9], 512
        $region60: #{tpu_custom_call.1} parent=47 // pred_fallthru
          _
        %s395 = sand.u32 %s59, 1
        %s396 = scalar_lea.sflag [#allocation6], %s395
        %s397 = sand.u32 %s59, 1
        %s398 = smul.addr %s397, 8
        %s399 = scalar_lea.vmem [#allocation5], %s398
        %p400 = pneg %p72
        %p401 = pneg %p69
        %p402 = pneg %p98
        %p403 = pneg %p95
        %p404 = scmp.lt.s32.totalorder %s37, 3
        %s405 = scalar_select %p404, %s37, 3
        %s406 = scalar_lea.vmem %s2, %s405
        %p407 = pneg %p124
        %p408 = pneg %p121
        %p409 = pneg %p145
        %p410 = pneg %p142
        %p411 = pneg %p166
        %p412 = pneg %p163
        %p413 = pneg %p187
        %p414 = pneg %p184
        %p415 = pneg %p208
        %p416 = pneg %p205
        %p417 = pneg %p236
        %p418 = pneg %p233
        %s419 = sand.u32 %s223, 1
        %s420 = scalar_lea.sflag [#allocation7], %s419
        %s421 = sand.u32 %s223, 1
        %s422 = smul.addr %s421, 8
        %s423 = scalar_lea.vmem [#allocation11], %s422
        %p424 = pneg %p264
        %p425 = pneg %p261
        %p426 = scmp.lt.s32.totalorder %s35, 1
        %s427 = scalar_select %p426, %s35, 1
        %p428 = scmp.lt.s32.totalorder %s36, 0
        %s429 = scalar_select %p428, %s36, 0
        %s430 = sadd.s32 %s429, %s427
        %s431 = smul.addr %s430, 8
        %s432 = scalar_lea.vmem %s8, %s431
        %p433 = pneg %p292
        %p434 = pneg %p289
        %p435 = scmp.lt.s32.totalorder %s35, 1
        %s436 = scalar_select %p435, %s35, 1
        %p437 = scmp.lt.s32.totalorder %s36, 0
        %s438 = scalar_select %p437, %s36, 0
        %s439 = sadd.s32 %s438, %s436
        %s440 = smul.addr %s439, 8
        %s441 = scalar_lea.vmem %s9, %s440
        %p442 = scmp.lt.s32.totalorder %s37, 3
        %s443 = scalar_select %p442, %s37, 3
        %s444 = scalar_lea.vmem %s2, %s443
        %p445 = scmp.lt.s32.totalorder %s35, 1
        %s446 = scalar_select %p445, %s35, 1
        %p447 = scmp.lt.s32.totalorder %s36, 0
        %s448 = scalar_select %p447, %s36, 0
        %s449 = sadd.s32 %s448, %s446
        %s450 = smul.addr %s449, 8
        %s451 = scalar_lea.vmem %s8, %s450
        %p452 = scmp.lt.s32.totalorder %s35, 1
        %s453 = scalar_select %p452, %s35, 1
        %p454 = scmp.lt.s32.totalorder %s36, 0
        %s455 = scalar_select %p454, %s36, 0
        %s456 = sadd.s32 %s455, %s453
        %s457 = smul.addr %s456, 8
        %s458 = scalar_lea.vmem %s9, %s457
        %p459 = scmp.eq.s32.totalorder %s37, 0
        // Predicated region
        $region61: #{tpu_custom_call.1} parent=47 // pred_check
          %p460 = pneg %p459
        $region62: #{tpu_custom_call.1} parent=47 // pred_check_branch
          %462 = sbr.rel (%p460) target = $region64
        $region63: #{tpu_custom_call.1} parent=47 // pred_region
          %v463 = vld [vmem:[%s382] sm:$0xff]
          %vm464 = vcmask 261120
          %465 = vst.msk [vmem:[#allocation2] sm:$0xff] %vm464, %v463
          %vm466 = vcmask 7168
          %467 = vst.msk [vmem:[#allocation3] sm:$0xff] %vm466, 0.0
          %468 = vst.msk [vmem:[%s423] sm:$0xff] %vm464, 0.0
          %469 = vst.msk [vmem:[%s451] sm:$0xff] %vm466, 0.0
          %470 = vst.msk [vmem:[%s458] sm:$0xff] %vm466, 0.0
        $region64: #{tpu_custom_call.1} parent=47 // pred_fallthru
          _
        %v471 = vld [vmem:[#allocation2] sm:$0xff]
        %v472 = vld [vmem:[#allocation8] sm:$0xff]
        %v473 = vadd.f32 %v471, %v472
        %v474 = vld [vmem:[%s444] sm:$0x1]
        %v476 = vlaneseq
        %v477 = vshrl.u32 %v476, 7
        %v478 = vsub.s32 0, %v477
        %v479 = vrot.slane %v474, %v478
        %v481 = vadd.f32 %v473, %v479
        %v482 = vld [vmem:[%s3] sm:$0x1]
        %v484 = vlaneseq
        %v485 = vshrl.u32 %v484, 7
        %v486 = vsub.s32 0, %v485
        %v487 = vrot.slane %v482, %v486
        %v489 = vmul.f32 %v481, %v487
        %vm490 = vcmask 261120
        %v491 = vsel %vm490, %v489, 0.0
        %492 = vadd.xlane.f32.xlu0 %v491
        %v493 = vpop.xlane.xlu0 %492
        %v494 = vld [vmem:[#allocation4] sm:$0x1]
        %v496 = vlaneseq
        %v497 = vshrl.u32 %v496, 7
        %v498 = vsub.s32 0, %v497
        %v499 = vrot.slane %v494, %v498
        %v501 = vadd.f32 %v493, %v499
        %v502 = vxor.u32 %v501, 2147483648
        %v503 = vmul.f32 %v502, 1.442695
        %v504 = vpow.pop %v503
        %v505 = vadd.f32 %v504, 1.0
        %v506 = vrcp.pop %v505
        %v507 = vmul.f32 1.0, %v506
        %v508 = vld [vmem:[#allocation3] sm:$0xff]
        %v509 = vld [vmem:[%s451] sm:$0xff]
        %v510 = vld [vmem:[%s458] sm:$0xff]
        %vm511 = vcmp.lt.f32.partialorder %v508, 1.0
        %v512 = vsel %vm511, 1, 0
        %v513 = vcvt.s32.f32 %v512
        %v514 = vmul.f32 %v507, %v513
        %v515 = vadd.f32 %v508, %v514
        %vm516 = vcmp.gt.f32.partialorder %v515, 0.9
        %v517 = vsel %vm516, 1, 0
        %v518 = vcvt.s32.f32 %v517
        %v519 = vmul.f32 %v518, %v513
        %vm520 = vcmp.le.f32.partialorder %v515, 0.9
        %v521 = vsel %vm520, 1, 0
        %v522 = vcvt.s32.f32 %v521
        %v523 = vmul.f32 %v522, %v513
        %v524 = vmul.f32 %v507, %v523
        %v525 = vadd.f32 %v508, %v524
        %v526 = vsub.f32 1.0, %v525
        %v527 = vmul.f32 %v519, %v526
        %v528 = vadd.f32 %v509, %v527
        %v529 = vmul.f32 %v519, %v528
        %v530 = vadd.f32 %v525, %v529
        %v531 = vadd.f32 %v510, %v523
        %v532 = vadd.f32 %v531, %v519
        %v533 = vadd.f32 %v524, %v529
        %v534 = vld [vmem:[#allocation10] sm:$0xff]
        %v535 = vld [vmem:[#allocation10 + $0x8] sm:$0xff]
        %v536 = vld [vmem:[#allocation10 + $0x10] sm:$0xff]
        %v537 = vld [vmem:[#allocation10 + $0x18] sm:$0xff]
        %v538 = vld [vmem:[%s6] sm:$0x1]
        %v540 = vlaneseq
        %v541 = vshrl.u32 %v540, 7
        %v542 = vsub.s32 0, %v541
        %v543 = vrot.slane %v538, %v542
        %v546 = vsel %vm490, %v481, 0
        %548 = vmatprep.subr.mxu0 0.0
        %549 = vmatpush1.msra.mxu0 %v534
        %550 = vmatprep.subr.mxu0 0.0
        %551 = vmatpush1.msra.mxu0 %v535
        %552 = vmatprep.subr.mxu0 0.0
        %553 = vmatpush1.msra.mxu0 %v536
        %554 = vmatprep.subr.mxu0 0.0
        %555 = vmatpush1.msra.mxu0 %v537
        %556 = vmatprep.subr.mxu0 0.0
        %557 = vmatpush1.msra.mxu0 0.0
        %558 = vmatprep.subr.mxu0 0.0
        %559 = vmatpush1.msra.mxu0 0.0
        %560 = vmatprep.subr.mxu0 0.0
        %561 = vmatpush1.msra.mxu0 0.0
        %562 = vmatprep.subr.mxu0 0.0
        %563 = vmatpush1.msra.mxu0 0.0
        %564 = vmatprep.subr.mxu0 0.0
        %565 = vmatpush1.msra.mxu0 0.0
        %566 = vmatprep.subr.mxu0 0.0
        %567 = vmatpush1.msra.mxu0 0.0
        %568 = vmatprep.subr.mxu0 0.0
        %569 = vmatpush1.msra.mxu0 0.0
        %570 = vmatprep.subr.mxu0 0.0
        %571 = vmatpush1.msra.mxu0 0.0
        %572 = vmatprep.subr.mxu0 0.0
        %573 = vmatpush1.msra.mxu0 0.0
        %574 = vmatprep.subr.mxu0 0.0
        %575 = vmatpush1.msra.mxu0 0.0
        %576 = vmatprep.subr.mxu0 0.0
        %577 = vmatpush1.msra.mxu0 0.0
        %578 = vmatprep.subr.mxu0 0.0
        %579 = vmatpush1.msra.mxu0 0.0
        %580 = vmatprep.subr.mxu0 0.0
        %581 = vmatpush1.msra.mxu0 0.0
        %582 = vmatprep.subr.mxu0 0.0
        %583 = vmatpush1.msra.mxu0 0.0
        %584 = vmatprep.subr.mxu0 0.0
        %585 = vmatpush1.msra.mxu0 0.0
        %586 = vmatprep.subr.mxu0 0.0
        %587 = vmatpush1.msra.mxu0 0.0
        %588 = vmatprep.subr.mxu0 0.0
        %589 = vmatpush1.msra.mxu0 0.0
        %590 = vmatprep.subr.mxu0 0.0
        %591 = vmatpush1.msra.mxu0 0.0
        %592 = vmatprep.subr.mxu0 0.0
        %593 = vmatpush1.msra.mxu0 0.0
        %594 = vmatprep.subr.mxu0 0.0
        %595 = vmatpush1.msra.mxu0 0.0
        %596 = vmatprep.subr.mxu0 0.0
        %597 = vmatpush1.msra.mxu0 0.0
        %598 = vmatprep.subr.mxu0 0.0
        %599 = vmatpush1.msra.mxu0 0.0
        %600 = vmatprep.subr.mxu0 0.0
        %601 = vmatpush1.msra.mxu0 0.0
        %602 = vmatprep.subr.mxu0 0.0
        %603 = vmatpush1.msra.mxu0 0.0
        %604 = vmatprep.subr.mxu0 0.0
        %605 = vmatpush1.msra.mxu0 0.0
        %606 = vmatprep.subr.mxu0 0.0
        %607 = vmatpush1.msra.mxu0 0.0
        %608 = vmatprep.subr.mxu0 0.0
        %609 = vmatpush1.msra.mxu0 0.0
        %610 = vmatprep.subr.mxu0 0.0
        %611 = vmatpush1.msra.mxu0 0.0
        %612 = vmatprep.mubr.f32.mxu0 0.0
        %613 = vmatmul.mubr.f32.gmra.mrb[0].mxu0 %v546
        %v614 = vpop.f32.mrb[0].mxu0
        %v615 = vadd.f32 %v543, %v614
        %v616 = vpop.f32.mrb[0].mxu0
        %617 = vdwg.mxu0
        %v618 = vmax.f32 %v615, 0.0
        %620 = vset.pattern.permute.xlu0 0
        %621 = vperm.xlu0 %620, %v533
        %v622 = vpop.permute.xlu0 %621
        %v624 = vmul.f32 %v618, %v622
        %v625 = vld [vmem:[%s423] sm:$0xff]
        %v626 = vsub.f32 1.0, %v533
        %628 = vset.pattern.permute.xlu0 0
        %629 = vperm.xlu0 %628, %v626
        %v630 = vpop.permute.xlu0 %629
        %v632 = vmul.f32 %v625, %v630
        %v633 = vadd.f32 %v624, %v632
        %634 = vst.msk [vmem:[%s423] sm:$0xff] %vm490, %v633
        %vm635 = vcmask 7168
        %636 = vst.msk [vmem:[%s451] sm:$0xff] %vm635, %v528
        %637 = vst.msk [vmem:[%s458] sm:$0xff] %vm635, %v532
        %638 = vst.msk [vmem:[#allocation2] sm:$0xff] %vm490, %v618
        %639 = vst.msk [vmem:[#allocation3] sm:$0xff] %vm635, %v530
        %s640 = sand.u32 %s223, 1
        %s641 = scalar_lea.sflag [#allocation7], %s640
        %s642 = sand.u32 %s223, 1
        %s643 = smul.addr %s642, 8
        %s644 = scalar_lea.vmem [#allocation11], %s643
        %p645 = scmp.lt.s32.totalorder %s35, 1
        %s646 = scalar_select %p645, %s35, 1
        %p647 = scmp.lt.s32.totalorder %s36, 0
        %s648 = scalar_select %p647, %s36, 0
        %s649 = sadd.s32 %s648, %s646
        %s650 = smul.addr %s649, 8
        %s651 = scalar_lea.vmem %s8, %s650
        %p652 = scmp.lt.s32.totalorder %s35, 1
        %s653 = scalar_select %p652, %s35, 1
        %p654 = scmp.lt.s32.totalorder %s36, 0
        %s655 = scalar_select %p654, %s36, 0
        %s656 = sadd.s32 %s655, %s653
        %s657 = smul.addr %s656, 8
        %s658 = scalar_lea.vmem %s9, %s657
        // Predicated region
        $region65: #{tpu_custom_call.1} parent=47 // pred_check
          %p659 = pneg %p233
        $region66: #{tpu_custom_call.1} parent=47 // pred_check_branch
          %661 = sbr.rel (%p659) target = $region68
        $region67: #{tpu_custom_call.1} parent=47 // pred_region
          %s663 = ssub.s32 128, 128
          %664 = vsyncadd %s641, %s663
          %s665 = sadd.s32 %s36, %s35
          %s666 = smul.addr %s665, 128
          %s667 = scalar_lea.hbm %s7, %s666
          %s669 = sshll.u32 %s644, 4
          %s670 = int_to_ptr.vmem [resolvable:$true] %s669
          %672 = dma.vmem_to_hbm [thread:$0]  %s670, 128, %s667, %s641
        $region68: #{tpu_custom_call.1} parent=47 // pred_fallthru
          _
        // Predicated region
        $region69: #{tpu_custom_call.1} parent=47 // pred_check
          %p673 = pneg %p261
        $region70: #{tpu_custom_call.1} parent=47 // pred_check_branch
          %675 = sbr.rel (%p673) target = $region72
        $region71: #{tpu_custom_call.1} parent=47 // pred_region
          _
        $region72: #{tpu_custom_call.1} parent=47 // pred_fallthru
          _
        // Predicated region
        $region73: #{tpu_custom_call.1} parent=47 // pred_check
          %p676 = pneg %p289
        $region74: #{tpu_custom_call.1} parent=47 // pred_check_branch
          %678 = sbr.rel (%p676) target = $region76
        $region75: #{tpu_custom_call.1} parent=47 // pred_region
          _
        $region76: #{tpu_custom_call.1} parent=47 // pred_fallthru
          _
      $region48: #{tpu_custom_call.1} parent=5 // pred_fallthru
        _
      %p679 = scmp.le.s32.totalorder 2, %s25
      // Predicated region
      $region77: #{tpu_custom_call.1} parent=5 // pred_check
        %p680 = pneg %p679
      $region78: #{tpu_custom_call.1} parent=5 // pred_check_branch
        %682 = sbr.rel (%p680) target = $region80
      $region79: #{tpu_custom_call.1} parent=5 // pred_region
        %s683 = ssub.s32 %s25, 2
        // Predicated region
        $region81: #{tpu_custom_call.1} parent=79 // pred_check
          %p684 = pneg %p239
        $region82: #{tpu_custom_call.1} parent=79 // pred_check_branch
          %686 = sbr.rel (%p684) target = $region84
        $region83: #{tpu_custom_call.1} parent=79 // pred_region
          %s687 = sand.u32 %s224, 1
          %s688 = scalar_lea.sflag [#allocation7], %s687
          %s689 = sand.u32 %s224, 1
          %s690 = smul.addr %s689, 8
          %s691 = scalar_lea.vmem [#allocation11], %s690
          %692 = dma.done %s688, 128
        $region84: #{tpu_custom_call.1} parent=79 // pred_fallthru
          _
        // Predicated region
        $region85: #{tpu_custom_call.1} parent=79 // pred_check
          %p693 = pneg %p267
        $region86: #{tpu_custom_call.1} parent=79 // pred_check_branch
          %695 = sbr.rel (%p693) target = $region88
        $region87: #{tpu_custom_call.1} parent=79 // pred_region
          %p696 = scmp.lt.s32.totalorder %s38, 1
          %s697 = scalar_select %p696, %s38, 1
          %p698 = scmp.lt.s32.totalorder %s39, 0
          %s699 = scalar_select %p698, %s39, 0
          %s700 = sadd.s32 %s699, %s697
          %s701 = smul.addr %s700, 8
          %s702 = scalar_lea.vmem %s8, %s701
        $region88: #{tpu_custom_call.1} parent=79 // pred_fallthru
          _
        // Predicated region
        $region89: #{tpu_custom_call.1} parent=79 // pred_check
          %p703 = pneg %p295
        $region90: #{tpu_custom_call.1} parent=79 // pred_check_branch
          %705 = sbr.rel (%p703) target = $region92
        $region91: #{tpu_custom_call.1} parent=79 // pred_region
          %p706 = scmp.lt.s32.totalorder %s38, 1
          %s707 = scalar_select %p706, %s38, 1
          %p708 = scmp.lt.s32.totalorder %s39, 0
          %s709 = scalar_select %p708, %s39, 0
          %s710 = sadd.s32 %s709, %s707
          %s711 = smul.addr %s710, 8
          %s712 = scalar_lea.vmem %s9, %s711
        $region92: #{tpu_custom_call.1} parent=79 // pred_fallthru
          _
      $region80: #{tpu_custom_call.1} parent=5 // pred_fallthru
        _
    $region6: #{tpu_custom_call.1} parent=1 // loop_footer
      %s29 = sadd.s32 1, %s25
    $region7: #{tpu_custom_call.1} parent=1 // loop_footer_branch
      %24 = sbr.rel target = $region3
    $region8: #{tpu_custom_call.1} parent=1 // loop_exit
      _
    %713 = vsyncpa [#allocation6], 1
    %s714 = scalar_lea.sflag [#allocation6], 1
    %715 = vsyncpa %s714, 1
    %716 = vsyncpa [#allocation9], 1
    %717 = vsyncpa [#allocation7], 1
    %s718 = scalar_lea.sflag [#allocation7], 1
    %719 = vsyncpa %s718, 1

</llo_original>
